<compile_context>
chip_gen: v7x
topology: tpu7x:2x2x1
jax: 0.10.0
libtpu: 0.0.40
codegen_flags: <defaults>
</compile_context>

<pallas_src>
import math

import jax
import jax.numpy as jnp
from jax.experimental import pallas as pl
from jax.experimental.pallas import tpu as pltpu


def timestep_embedder_kernel(t_ref, freqs_ref, w1s_ref, w1c_ref, b1_ref, w2_ref, b2_ref, o_ref):
    # t_ref:    (B, half)  f32, timestep value replicated across lanes (lane-dense)
    # freqs_ref:(1, half)  f32, host-precomputed frequency table
    # w1s_ref:  (half, D)  bf16, rows of W1 that multiply sin(args)
    # w1c_ref:  (half, D)  bf16, rows of W1 that multiply cos(args)
    # b1/b2:    (1, D)     f32
    # w2_ref:   (D, D)     bf16
    args = t_ref[...] * freqs_ref[...]                       # (B, half)
    sin_e = jnp.sin(args).astype(w1s_ref.dtype)              # bf16 MXU operands
    cos_e = jnp.cos(args).astype(w1c_ref.dtype)

    # First Linear: emb @ W1 == sin @ W1[:half] + cos @ W1[half:]  (no lane-axis concat).
    h = (jnp.dot(sin_e, w1s_ref[...], preferred_element_type=jnp.float32)
         + jnp.dot(cos_e, w1c_ref[...], preferred_element_type=jnp.float32)
         + b1_ref[...])

    # SiLU in f32 (v5e has no bf16 VPU/EUP); cast to bf16 only for the second MXU operand.
    h = h * jax.nn.sigmoid(h)

    out = jnp.dot(h.astype(w2_ref.dtype), w2_ref[...],
                  preferred_element_type=jnp.float32) + b2_ref[...]
    o_ref[...] = out.astype(o_ref.dtype)


def timestep_embedder(timesteps, w1, b1, w2, b2):
    """timesteps: (B,) float32; w1: (F, D); w2: (D, D); returns (B, D) float32."""
    B = timesteps.shape[0]
    F, D = w1.shape
    half = F // 2
    # TODO(synk): the original module appends an extra sin(args) block when half_dims is odd;
    # that branch is not implemented here (default frequency_embedding_size=256 never hits it).

    # Host-side constant frequency table (hoisted out of the kernel).
    freqs = jnp.exp(
        jnp.arange(half, dtype=jnp.float32) * (-math.log(10000.0) / half)
    ).reshape(1, half)

    # Lane-dense timestep layout: (B, half) instead of a lane-width-1 (B, 1) tile.
    t_b = jnp.broadcast_to(timesteps.astype(jnp.float32).reshape(B, 1), (B, half))

    # bf16 weights halve HBM->VMEM bytes; f32 accumulation in the kernel.
    # Split W1 into its sin-rows / cos-rows so the kernel never concatenates along lanes.
    w1_sin = w1[:half, :].astype(jnp.bfloat16)
    w1_cos = w1[half:, :].astype(jnp.bfloat16)
    w2_bf = w2.astype(jnp.bfloat16)
    b1_2d = b1.reshape(1, D).astype(jnp.float32)
    b2_2d = b2.reshape(1, D).astype(jnp.float32)

    vmem = pl.BlockSpec(memory_space=pltpu.MemorySpace.VMEM)
    # No grid: the whole problem (~100 KiB resident) fits VMEM on v5e/v6e/v7x with huge margin.
    # TODO(synk): if B ever grows large (per-token timesteps), add a "parallel" batch grid axis
    # so v7x's two TensorCores and the DMA pipeline engage; pure overhead at B=8.
    return pl.pallas_call(
        timestep_embedder_kernel,
        out_shape=jax.ShapeDtypeStruct((B, D), jnp.float32),
        in_specs=[vmem] * 7,
        out_specs=vmem,
    )(t_b, freqs, w1_sin, w1_cos, b1_2d, w2_bf, b2_2d)


def reference_f32(timesteps, w1, b1, w2, b2):
    """Pure-JAX f32 reference matching the PyTorch forward semantics ([sin, cos] order)."""
    F = w1.shape[0]
    half = F // 2
    freqs = jnp.exp(jnp.arange(half, dtype=jnp.float32) * (-math.log(10000.0) / half))
    args = timesteps.astype(jnp.float32)[:, None] * freqs[None, :]
    emb = jnp.concatenate([jnp.sin(args), jnp.cos(args)], axis=-1)
    h = emb @ w1 + b1
    h = h * jax.nn.sigmoid(h)
    return h @ w2 + b2


def reference_bf16_numerics(timesteps, w1, b1, w2, b2):
    """Reference that mimics the kernel's bf16-operand / f32-accumulate numerics."""
    F = w1.shape[0]
    half = F // 2
    freqs = jnp.exp(jnp.arange(half, dtype=jnp.float32) * (-math.log(10000.0) / half))
    args = timesteps.astype(jnp.float32)[:, None] * freqs[None, :]
    sin_e = jnp.sin(args).astype(jnp.bfloat16)
    cos_e = jnp.cos(args).astype(jnp.bfloat16)
    w1b = w1.astype(jnp.bfloat16)
    w2b = w2.astype(jnp.bfloat16)
    h = (jnp.dot(sin_e, w1b[:half, :], preferred_element_type=jnp.float32)
         + jnp.dot(cos_e, w1b[half:, :], preferred_element_type=jnp.float32)
         + b1)
    h = h * jax.nn.sigmoid(h)
    return jnp.dot(h.astype(jnp.bfloat16), w2b, preferred_element_type=jnp.float32) + b2


if __name__ == "__main__":
    d_embedding = 128
    frequency_embedding_size = 256
    batch = 8

    key = jax.random.PRNGKey(0)
    k_t, k_w1, k_b1, k_w2, k_b2 = jax.random.split(key, 5)

    timesteps = jax.random.uniform(k_t, (batch,), jnp.float32, 0.0, 1000.0)

    # Deterministic parameter init (PyTorch Linear-style uniform bounds).
    bound1 = 1.0 / math.sqrt(frequency_embedding_size)
    bound2 = 1.0 / math.sqrt(d_embedding)
    w1 = jax.random.uniform(k_w1, (frequency_embedding_size, d_embedding),
                            jnp.float32, -bound1, bound1)
    b1 = jax.random.uniform(k_b1, (d_embedding,), jnp.float32, -bound1, bound1)
    w2 = jax.random.uniform(k_w2, (d_embedding, d_embedding),
                            jnp.float32, -bound2, bound2)
    b2 = jax.random.uniform(k_b2, (d_embedding,), jnp.float32, -bound2, bound2)

    out = jax.block_until_ready(timestep_embedder(timesteps, w1, b1, w2, b2))
    assert out.shape == (batch, d_embedding)

    # Tight check vs. a reference with matching bf16-operand numerics,
    # loose check vs. the pure-f32 PyTorch-semantics reference (bf16 weight quantization gap).
    ref_bf = reference_bf16_numerics(timesteps, w1, b1, w2, b2)
    ref_32 = reference_f32(timesteps, w1, b1, w2, b2)
    assert jnp.allclose(out, ref_bf, atol=1e-2, rtol=1e-2), "mismatch vs bf16-numerics reference"
    assert jnp.allclose(out, ref_32, atol=5e-2, rtol=5e-2), "mismatch vs f32 reference"

    print("KERNEL_OK")
</pallas_src>

<mosaic_0001>
module attributes {stable_mosaic.version = 11 : i64} {
  func.func @timestep_embedder_kernel(%arg0: memref<8x128xf32, #tpu.memory_space<vmem>>, %arg1: memref<1x128xf32, #tpu.memory_space<vmem>>, %arg2: memref<128x128xbf16, #tpu.memory_space<vmem>>, %arg3: memref<128x128xbf16, #tpu.memory_space<vmem>>, %arg4: memref<1x128xf32, #tpu.memory_space<vmem>>, %arg5: memref<128x128xbf16, #tpu.memory_space<vmem>>, %arg6: memref<1x128xf32, #tpu.memory_space<vmem>>, %arg7: memref<8x128xf32, #tpu.memory_space<vmem>>) attributes {dimension_semantics = [], scalar_prefetch = 0 : i64, scratch_operands = 0 : i64, tpu.core_type = #tpu.core_type<tc>} {
    %c0 = arith.constant 0 : index
    %c0_0 = arith.constant 0 : index
    %0 = vector.load %arg0[%c0, %c0_0] : memref<8x128xf32, #tpu.memory_space<vmem>>, vector<8x128xf32>
    %c0_1 = arith.constant 0 : index
    %c0_2 = arith.constant 0 : index
    %1 = vector.load %arg1[%c0_1, %c0_2] : memref<1x128xf32, #tpu.memory_space<vmem>>, vector<1x128xf32>
    %2 = vector.broadcast %1 : vector<1x128xf32> to vector<8x128xf32>
    %3 = arith.mulf %0, %2 : vector<8x128xf32>
    %4 = math.sin %3 : vector<8x128xf32>
    %5 = arith.truncf %4 : vector<8x128xf32> to vector<8x128xbf16>
    %6 = math.cos %3 : vector<8x128xf32>
    %7 = arith.truncf %6 : vector<8x128xf32> to vector<8x128xbf16>
    %c0_3 = arith.constant 0 : index
    %c0_4 = arith.constant 0 : index
    %8 = vector.load %arg2[%c0_3, %c0_4] : memref<128x128xbf16, #tpu.memory_space<vmem>>, vector<128x128xbf16>
    %cst = arith.constant dense<0.000000e+00> : vector<8x128xf32>
    %9 = tpu.matmul %5, %8, %cst {dimension_numbers = #tpu.dot_dimension_numbers<[1], [0], [0], [1], [0, 0, 1, 1], [], []>} : vector<8x128xbf16>, vector<128x128xbf16>, vector<8x128xf32> -> vector<8x128xf32>
    %c0_5 = arith.constant 0 : index
    %c0_6 = arith.constant 0 : index
    %10 = vector.load %arg3[%c0_5, %c0_6] : memref<128x128xbf16, #tpu.memory_space<vmem>>, vector<128x128xbf16>
    %cst_7 = arith.constant dense<0.000000e+00> : vector<8x128xf32>
    %11 = tpu.matmul %7, %10, %cst_7 {dimension_numbers = #tpu.dot_dimension_numbers<[1], [0], [0], [1], [0, 0, 1, 1], [], []>} : vector<8x128xbf16>, vector<128x128xbf16>, vector<8x128xf32> -> vector<8x128xf32>
    %12 = arith.addf %9, %11 : vector<8x128xf32>
    %c0_8 = arith.constant 0 : index
    %c0_9 = arith.constant 0 : index
    %13 = vector.load %arg4[%c0_8, %c0_9] : memref<1x128xf32, #tpu.memory_space<vmem>>, vector<1x128xf32>
    %14 = vector.broadcast %13 : vector<1x128xf32> to vector<8x128xf32>
    %15 = arith.addf %12, %14 : vector<8x128xf32>
    %16 = arith.negf %15 : vector<8x128xf32>
    %17 = math.exp %16 : vector<8x128xf32>
    %cst_10 = arith.constant 1.000000e+00 : f32
    %18 = vector.broadcast %cst_10 : f32 to vector<8x128xf32>
    %19 = arith.addf %18, %17 : vector<8x128xf32>
    %20 = arith.divf %18, %19 : vector<8x128xf32>
    %21 = arith.mulf %15, %20 : vector<8x128xf32>
    %22 = arith.truncf %21 : vector<8x128xf32> to vector<8x128xbf16>
    %c0_11 = arith.constant 0 : index
    %c0_12 = arith.constant 0 : index
    %23 = vector.load %arg5[%c0_11, %c0_12] : memref<128x128xbf16, #tpu.memory_space<vmem>>, vector<128x128xbf16>
    %cst_13 = arith.constant dense<0.000000e+00> : vector<8x128xf32>
    %24 = tpu.matmul %22, %23, %cst_13 {dimension_numbers = #tpu.dot_dimension_numbers<[1], [0], [0], [1], [0, 0, 1, 1], [], []>} : vector<8x128xbf16>, vector<128x128xbf16>, vector<8x128xf32> -> vector<8x128xf32>
    %c0_14 = arith.constant 0 : index
    %c0_15 = arith.constant 0 : index
    %25 = vector.load %arg6[%c0_14, %c0_15] : memref<1x128xf32, #tpu.memory_space<vmem>>, vector<1x128xf32>
    %26 = vector.broadcast %25 : vector<1x128xf32> to vector<8x128xf32>
    %27 = arith.addf %24, %26 : vector<8x128xf32>
    %c0_16 = arith.constant 0 : index
    %c0_17 = arith.constant 0 : index
    %28 = vector.load %arg7[%c0_16, %c0_17] : memref<8x128xf32, #tpu.memory_space<vmem>>, vector<8x128xf32>
    tpu.vector_store %arg7[%c0_16, %c0_17], %27 {strides = array<i32>} : memref<8x128xf32, #tpu.memory_space<vmem>>, vector<8x128xf32>,
    return
  }
}

</mosaic_0001>

<llo_original>
// kernel: tpu_custom_call.1
$region0: #{tpu_custom_call.1}
  #allocation0 [shape = 'u32[]', space=smem, size = 0x4, offset = 0x4, fixed_abs, tag = 'smem constant byte address 0x4 - core index']
  #allocation1 [shape = 'u32[144,128]{1,0:T(1,128)}', space=vmem, size = 0x12000, scoped, tag = 'internal scratch']
  %s0 = inlined_call_operand.hbm [shape: f32[8,128], index: 0, kind: input, shape index: {}]
  %s1 = inlined_call_operand.vmem [shape: f32[1,128], index: 1, kind: input, shape index: {}]
  %s2 = inlined_call_operand.hbm [shape: bf16[128,128], index: 2, kind: input, shape index: {}]
  %s3 = inlined_call_operand.hbm [shape: bf16[128,128], index: 3, kind: input, shape index: {}]
  %s4 = inlined_call_operand.vmem [shape: f32[1,128], index: 4, kind: input, shape index: {}]
  %s5 = inlined_call_operand.hbm [shape: bf16[128,128], index: 5, kind: input, shape index: {}]
  %s6 = inlined_call_operand.vmem [shape: f32[1,128], index: 6, kind: input, shape index: {}]
  %s7 = inlined_call_operand.hbm [shape: f32[8,128], index: 7, kind: output, shape index: {}]
  %s8 = sld [smem:[#allocation0]]
  $region54: #{tpu_custom_call.1} parent=0
    _
  %s10 = ssub.s32 1, %s8
  %s11 = scalar_select 0, %s10, %s8
  $region1: #{tpu_custom_call.1} parent=0
    #allocation2 [shape = 'u8[4096]{0}', space=vmem, size = 0x1000, scoped, tag = 'input window, operand 0, single buffered']
    #allocation3 [shape = 's32[1]{0}', space=sflag, size = 0x4, scoped, tag = 'scoped memory for tpu_custom_call.1']
    #allocation4 [shape = 's32[1]{0}', space=sflag, size = 0x4, scoped, tag = 'scoped memory for tpu_custom_call.1']
    #allocation5 [shape = 'u8[32768]{0}', space=vmem, size = 0x8000, scoped, tag = 'input window, operand 2, single buffered']
    #allocation6 [shape = 's32[1]{0}', space=sflag, size = 0x4, scoped, tag = 'scoped memory for tpu_custom_call.1']
    #allocation7 [shape = 'u8[32768]{0}', space=vmem, size = 0x8000, scoped, tag = 'input window, operand 3, single buffered']
    #allocation8 [shape = 'u8[32768]{0}', space=vmem, size = 0x8000, scoped, tag = 'input window, operand 5, single buffered']
    #allocation9 [shape = 's32[1]{0}', space=sflag, size = 0x4, scoped, tag = 'scoped memory for tpu_custom_call.1']
    #allocation10 [shape = 'u8[4096]{0}', space=vmem, size = 0x1000, scoped, tag = 'output window, operand 0, single buffered']
    %12 = vsyncpa [#allocation3], 0
    %13 = vsyncpa [#allocation6], 0
    %14 = vsyncpa [#allocation9], 0
    %15 = vsyncpa [#allocation4], 0
    // Predicated region
    $region2: #{tpu_custom_call.1} parent=1 // pred_check
      _
    $region3: #{tpu_custom_call.1} parent=1 // pred_check_branch
      %17 = sbr.rel (0) target = $region5
    $region4: #{tpu_custom_call.1} parent=1 // pred_region
      %s19 = ssub.s32 128, 128
      %20 = vsyncadd [#allocation3], %s19
      %s22 = sshll.u32 [#allocation2], 4
      %s23 = int_to_ptr.vmem [resolvable:$true] %s22
      %25 = dma.hbm_to_vmem [thread:$0]  %s0, 128, %s23, [#allocation3]
    $region5: #{tpu_custom_call.1} parent=1 // pred_fallthru
      _
    // Predicated region
    $region6: #{tpu_custom_call.1} parent=1 // pred_check
      _
    $region7: #{tpu_custom_call.1} parent=1 // pred_check_branch
      %27 = sbr.rel (0) target = $region9
    $region8: #{tpu_custom_call.1} parent=1 // pred_region
      _
    $region9: #{tpu_custom_call.1} parent=1 // pred_fallthru
      _
    // Predicated region
    $region10: #{tpu_custom_call.1} parent=1 // pred_check
      _
    $region11: #{tpu_custom_call.1} parent=1 // pred_check_branch
      %29 = sbr.rel (0) target = $region13
    $region12: #{tpu_custom_call.1} parent=1 // pred_region
      %s31 = ssub.s32 1024, 1024
      %32 = vsyncadd [#allocation6], %s31
      %s33 = sshll.u32 [#allocation5], 4
      %s34 = int_to_ptr.vmem [resolvable:$true] %s33
      %39 = dma.hbm_to_vmem [thread:$0]  %s2, 1024, %s34, [#allocation6], 64, 64, 4
    $region13: #{tpu_custom_call.1} parent=1 // pred_fallthru
      _
    // Predicated region
    $region14: #{tpu_custom_call.1} parent=1 // pred_check
      _
    $region15: #{tpu_custom_call.1} parent=1 // pred_check_branch
      %41 = sbr.rel (0) target = $region17
    $region16: #{tpu_custom_call.1} parent=1 // pred_region
      %s43 = ssub.s32 1024, 1024
      %44 = vsyncadd [#allocation6], %s43
      %s45 = sshll.u32 [#allocation7], 4
      %s46 = int_to_ptr.vmem [resolvable:$true] %s45
      %51 = dma.hbm_to_vmem [thread:$0]  %s3, 1024, %s46, [#allocation6], 64, 64, 4
    $region17: #{tpu_custom_call.1} parent=1 // pred_fallthru
      _
    // Predicated region
    $region18: #{tpu_custom_call.1} parent=1 // pred_check
      _
    $region19: #{tpu_custom_call.1} parent=1 // pred_check_branch
      %53 = sbr.rel (0) target = $region21
    $region20: #{tpu_custom_call.1} parent=1 // pred_region
      _
    $region21: #{tpu_custom_call.1} parent=1 // pred_fallthru
      _
    // Predicated region
    $region22: #{tpu_custom_call.1} parent=1 // pred_check
      _
    $region23: #{tpu_custom_call.1} parent=1 // pred_check_branch
      %55 = sbr.rel (0) target = $region25
    $region24: #{tpu_custom_call.1} parent=1 // pred_region
      %s57 = ssub.s32 1024, 1024
      %58 = vsyncadd [#allocation9], %s57
      %s59 = sshll.u32 [#allocation8], 4
      %s60 = int_to_ptr.vmem [resolvable:$true] %s59
      %65 = dma.hbm_to_vmem [thread:$0]  %s5, 1024, %s60, [#allocation9], 64, 64, 4
    $region25: #{tpu_custom_call.1} parent=1 // pred_fallthru
      _
    // Predicated region
    $region26: #{tpu_custom_call.1} parent=1 // pred_check
      _
    $region27: #{tpu_custom_call.1} parent=1 // pred_check_branch
      %67 = sbr.rel (0) target = $region29
    $region28: #{tpu_custom_call.1} parent=1 // pred_region
      _
    $region29: #{tpu_custom_call.1} parent=1 // pred_fallthru
      _
    // Predicated region
    $region30: #{tpu_custom_call.1} parent=1 // pred_check
      _
    $region31: #{tpu_custom_call.1} parent=1 // pred_check_branch
      %69 = sbr.rel (0) target = $region33
    $region32: #{tpu_custom_call.1} parent=1 // pred_region
      %70 = dma.done [#allocation3], 128
    $region33: #{tpu_custom_call.1} parent=1 // pred_fallthru
      _
    // Predicated region
    $region34: #{tpu_custom_call.1} parent=1 // pred_check
      _
    $region35: #{tpu_custom_call.1} parent=1 // pred_check_branch
      %72 = sbr.rel (0) target = $region37
    $region36: #{tpu_custom_call.1} parent=1 // pred_region
      %73 = dma.done [#allocation6], 1024
    $region37: #{tpu_custom_call.1} parent=1 // pred_fallthru
      _
    // Predicated region
    $region38: #{tpu_custom_call.1} parent=1 // pred_check
      _
    $region39: #{tpu_custom_call.1} parent=1 // pred_check_branch
      %75 = sbr.rel (0) target = $region41
    $region40: #{tpu_custom_call.1} parent=1 // pred_region
      %76 = dma.done [#allocation6], 1024
    $region41: #{tpu_custom_call.1} parent=1 // pred_fallthru
      _
    // Predicated region
    $region42: #{tpu_custom_call.1} parent=1 // pred_check
      _
    $region43: #{tpu_custom_call.1} parent=1 // pred_check_branch
      %78 = sbr.rel (0) target = $region45
    $region44: #{tpu_custom_call.1} parent=1 // pred_region
      %79 = dma.done [#allocation9], 1024
    $region45: #{tpu_custom_call.1} parent=1 // pred_fallthru
      _
    %v81 = vld [vmem:[#allocation2] sm:$0xff]
    %v82 = vld [vmem:[%s1] sm:$0x1]
    %v84 = vlaneseq
    %v85 = vshrl.u32 %v84, 7
    %v86 = vsub.s32 0, %v85
    %v87 = vrot.slane %v82, %v86
    %v89 = vmul.f32 %v81, %v87
    %v90 = vand.u32 2147483647, %v89
    %vm91 = vcmp.le.f32.partialorder %v90, 0.7853982
    %vm92 = vcmp.lt.s32.totalorder %v89, 0
    %v93 = vand.u32 %v89, 2139095040
    %v94 = vshrl.u32 %v93, 23
    %v95 = vsub.s32 %v94, 127
    %v96 = vand.u32 2147483647, %v89
    %v97 = vand.u32 %v96, 8388607
    %v98 = vor.u32 %v97, 8388608
    %v99 = vsub.s32 0, %v98
    %v100 = vadd.s32 %v95, 1
    %vm101 = vcmp.gt.s32.totalorder %v100, 0
    %v102 = vsel %vm101, %v100, 0
    %v103 = vshrl.u32 %v102, 5
    %v104 = vand.u32 %v102, 31
    %v105 = vsub.s32 32, %v104
    %v106 = vshrl.u32 683565275, %v105
    %v107 = vshll.u32 683565275, %v104
    %v108 = vshrl.u32 2475754826, %v105
    %v109 = vor.u32 %v107, %v108
    %v110 = vshll.u32 2475754826, %v104
    %v111 = vshrl.u32 2131351028, %v105
    %v112 = vor.u32 %v110, %v111
    %v113 = vshll.u32 2131351028, %v104
    %v114 = vshrl.u32 2102212464, %v105
    %v115 = vor.u32 %v113, %v114
    %v116 = vshll.u32 2102212464, %v104
    %v117 = vshrl.u32 920167782, %v105
    %v118 = vor.u32 %v116, %v117
    %v119 = vshll.u32 920167782, %v104
    %v120 = vshrl.u32 1326507024, %v105
    %v121 = vor.u32 %v119, %v120
    %vm122 = vcmp.lt.s32.totalorder %v103, 1
    %vm123 = vcmp.lt.s32.totalorder %v103, 2
    %vm124 = vcmp.lt.s32.totalorder %v103, 3
    %vm125 = vcmp.lt.s32.totalorder %v103, 4
    %v126 = vsel %vm122, %v106, %v109
    %v127 = vsel %vm125, %v115, 2102212464
    %v128 = vsel %vm124, %v112, %v127
    %v129 = vsel %vm123, %v126, %v128
    %v130 = vsel %vm122, %v109, %v112
    %v131 = vsel %vm125, %v118, 920167782
    %v132 = vsel %vm124, %v115, %v131
    %v133 = vsel %vm123, %v130, %v132
    %v134 = vsel %vm122, %v112, %v115
    %v135 = vsel %vm125, %v121, 1326507024
    %v136 = vsel %vm124, %v118, %v135
    %v137 = vsel %vm123, %v134, %v136
    %v138 = vshll.u32 %v98, 8
    %v139 = vmul.u32.u64.compose %v138, %v137
    %v140 = vextract.low.u32 %v139
    %v141 = vextract.high.u32 %v139
    %v142 = vmul.u32.u64.compose %v138, %v133
    %v143 = vextract.low.u32 %v142
    %v144 = vextract.high.u32 %v142
    %v145 = vmul.u32 %v138, %v129
    %v146 = vadd.s32 %v141, %v143
    %vm147 = vc.u32 %v141, %v143
    %v148 = vadd.s32 %v144, 1
    %v149 = vsel %vm147, %v148, %v144
    %v150 = vadd.s32 %v145, %v149
    %v151 = vadd.s32 %v150, 536870912
    %v152 = vshrl.u32 %v151, 30
    %v153 = vshll.u32 %v152, 30
    %v154 = vsub.s32 %v150, %v153
    %vm155 = vcmp.lt.s32.totalorder %v154, 0
    %v156 = vsub.s32 0, %v154
    %v157 = vsel %vm155, %v156, %v154
    %v158 = vclz %v157
    %v159 = vsub.s32 %v158, 2
    %vm160 = vcmp.gt.s32.totalorder 0, %v159
    %v161 = vsel %vm160, 0, %v159
    %v162 = vsub.s32 32, %v161
    %v163 = vshll.u32 %v154, %v161
    %v164 = vshrl.u32 %v146, %v162
    %v165 = vor.u32 %v163, %v164
    %v166 = vsub.s32 4294967266, %v161
    %v167 = vadd.s32 %v166, 127
    %v168 = vshll.u32 %v167, 23
    %v169 = vor.u32 4788187, %v168
    %v170 = vand.u32 2147483647, %v169
    %v172 = vcvt.s32.f32 %v165
    %v173 = vmul.f32 %v172, %v170
    %v174 = vxor.u32 %v173, 2147483648
    %v175 = vsel %vm92, %v174, %v173
    %v176 = vsub.s32 4, %v152
    %v177 = vsel %vm92, %v176, %v152
    %v178 = vsel %vm91, %v89, %v175
    %v179 = vsel %vm91, 0, %v177
    %v180 = vcosq.f32.pop %v178
    %v181 = vsinq.f32.pop %v178
    %vm182 = vweird.f32 %v89
    %v183 = vadd.s32 %v179, 3
    %v184 = vand.u32 %v183, 3
    %vm185 = vcmp.lt.s32.totalorder %v184, 2
    %vm186 = vcmp.eq.s32.totalorder %v184, 0
    %v187 = vxor.u32 %v181, 2147483648
    %v188 = vsel %vm186, %v180, %v187
    %vm189 = vcmp.eq.s32.totalorder %v184, 2
    %v190 = vxor.u32 %v180, 2147483648
    %v191 = vsel %vm189, %v190, %v181
    %v192 = vsel %vm185, %v188, %v191
    %v193 = vsel %vm182, nan, %v192
    %v194 = vpack.c.bf16 %v193, %v193
    %v195 = vand.u32 2147483647, %v89
    %vm196 = vcmp.le.f32.partialorder %v195, 0.7853982
    %vm197 = vcmp.lt.s32.totalorder %v89, 0
    %v198 = vand.u32 %v89, 2139095040
    %v199 = vshrl.u32 %v198, 23
    %v200 = vsub.s32 %v199, 127
    %v201 = vand.u32 2147483647, %v89
    %v202 = vand.u32 %v201, 8388607
    %v203 = vor.u32 %v202, 8388608
    %v204 = vsub.s32 0, %v203
    %v205 = vadd.s32 %v200, 1
    %vm206 = vcmp.gt.s32.totalorder %v205, 0
    %v207 = vsel %vm206, %v205, 0
    %v208 = vshrl.u32 %v207, 5
    %v209 = vand.u32 %v207, 31
    %v210 = vsub.s32 32, %v209
    %v211 = vshrl.u32 683565275, %v210
    %v212 = vshll.u32 683565275, %v209
    %v213 = vshrl.u32 2475754826, %v210
    %v214 = vor.u32 %v212, %v213
    %v215 = vshll.u32 2475754826, %v209
    %v216 = vshrl.u32 2131351028, %v210
    %v217 = vor.u32 %v215, %v216
    %v218 = vshll.u32 2131351028, %v209
    %v219 = vshrl.u32 2102212464, %v210
    %v220 = vor.u32 %v218, %v219
    %v221 = vshll.u32 2102212464, %v209
    %v222 = vshrl.u32 920167782, %v210
    %v223 = vor.u32 %v221, %v222
    %v224 = vshll.u32 920167782, %v209
    %v225 = vshrl.u32 1326507024, %v210
    %v226 = vor.u32 %v224, %v225
    %vm227 = vcmp.lt.s32.totalorder %v208, 1
    %vm228 = vcmp.lt.s32.totalorder %v208, 2
    %vm229 = vcmp.lt.s32.totalorder %v208, 3
    %vm230 = vcmp.lt.s32.totalorder %v208, 4
    %v231 = vsel %vm227, %v211, %v214
    %v232 = vsel %vm230, %v220, 2102212464
    %v233 = vsel %vm229, %v217, %v232
    %v234 = vsel %vm228, %v231, %v233
    %v235 = vsel %vm227, %v214, %v217
    %v236 = vsel %vm230, %v223, 920167782
    %v237 = vsel %vm229, %v220, %v236
    %v238 = vsel %vm228, %v235, %v237
    %v239 = vsel %vm227, %v217, %v220
    %v240 = vsel %vm230, %v226, 1326507024
    %v241 = vsel %vm229, %v223, %v240
    %v242 = vsel %vm228, %v239, %v241
    %v243 = vshll.u32 %v203, 8
    %v244 = vmul.u32.u64.compose %v243, %v242
    %v245 = vextract.low.u32 %v244
    %v246 = vextract.high.u32 %v244
    %v247 = vmul.u32.u64.compose %v243, %v238
    %v248 = vextract.low.u32 %v247
    %v249 = vextract.high.u32 %v247
    %v250 = vmul.u32 %v243, %v234
    %v251 = vadd.s32 %v246, %v248
    %vm252 = vc.u32 %v246, %v248
    %v253 = vadd.s32 %v249, 1
    %v254 = vsel %vm252, %v253, %v249
    %v255 = vadd.s32 %v250, %v254
    %v256 = vadd.s32 %v255, 536870912
    %v257 = vshrl.u32 %v256, 30
    %v258 = vshll.u32 %v257, 30
    %v259 = vsub.s32 %v255, %v258
    %vm260 = vcmp.lt.s32.totalorder %v259, 0
    %v261 = vsub.s32 0, %v259
    %v262 = vsel %vm260, %v261, %v259
    %v263 = vclz %v262
    %v264 = vsub.s32 %v263, 2
    %vm265 = vcmp.gt.s32.totalorder 0, %v264
    %v266 = vsel %vm265, 0, %v264
    %v267 = vsub.s32 32, %v266
    %v268 = vshll.u32 %v259, %v266
    %v269 = vshrl.u32 %v251, %v267
    %v270 = vor.u32 %v268, %v269
    %v271 = vsub.s32 4294967266, %v266
    %v272 = vadd.s32 %v271, 127
    %v273 = vshll.u32 %v272, 23
    %v274 = vor.u32 4788187, %v273
    %v275 = vand.u32 2147483647, %v274
    %v277 = vcvt.s32.f32 %v270
    %v278 = vmul.f32 %v277, %v275
    %v279 = vxor.u32 %v278, 2147483648
    %v280 = vsel %vm197, %v279, %v278
    %v281 = vsub.s32 4, %v257
    %v282 = vsel %vm197, %v281, %v257
    %v283 = vsel %vm196, %v89, %v280
    %v284 = vsel %vm196, 0, %v282
    %v285 = vcosq.f32.pop %v283
    %v286 = vsinq.f32.pop %v283
    %vm287 = vweird.f32 %v89
    %v288 = vand.u32 %v284, 3
    %vm289 = vcmp.lt.s32.totalorder %v288, 2
    %vm290 = vcmp.eq.s32.totalorder %v288, 0
    %v291 = vxor.u32 %v286, 2147483648
    %v292 = vsel %vm290, %v285, %v291
    %vm293 = vcmp.eq.s32.totalorder %v288, 2
    %v294 = vxor.u32 %v285, 2147483648
    %v295 = vsel %vm293, %v294, %v286
    %v296 = vsel %vm289, %v292, %v295
    %v297 = vsel %vm287, nan, %v296
    %v298 = vpack.c.bf16 %v297, %v297
    %v299 = vld [vmem:[#allocation5] sm:$0xf]
    %v300 = vld [vmem:[#allocation5 + $0x4] sm:$0xf]
    %v301 = vld [vmem:[#allocation5 + $0x8] sm:$0xf]
    %v302 = vld [vmem:[#allocation5 + $0xc] sm:$0xf]
    %v303 = vld [vmem:[#allocation5 + $0x10] sm:$0xf]
    %v304 = vld [vmem:[#allocation5 + $0x14] sm:$0xf]
    %v305 = vld [vmem:[#allocation5 + $0x18] sm:$0xf]
    %v306 = vld [vmem:[#allocation5 + $0x1c] sm:$0xf]
    %v307 = vld [vmem:[#allocation5 + $0x20] sm:$0xf]
    %v308 = vld [vmem:[#allocation5 + $0x24] sm:$0xf]
    %v309 = vld [vmem:[#allocation5 + $0x28] sm:$0xf]
    %v310 = vld [vmem:[#allocation5 + $0x2c] sm:$0xf]
    %v311 = vld [vmem:[#allocation5 + $0x30] sm:$0xf]
    %v312 = vld [vmem:[#allocation5 + $0x34] sm:$0xf]
    %v313 = vld [vmem:[#allocation5 + $0x38] sm:$0xf]
    %v314 = vld [vmem:[#allocation5 + $0x3c] sm:$0xf]
    %v315 = vld [vmem:[#allocation7] sm:$0xf]
    %v316 = vld [vmem:[#allocation7 + $0x4] sm:$0xf]
    %v317 = vld [vmem:[#allocation7 + $0x8] sm:$0xf]
    %v318 = vld [vmem:[#allocation7 + $0xc] sm:$0xf]
    %v319 = vld [vmem:[#allocation7 + $0x10] sm:$0xf]
    %v320 = vld [vmem:[#allocation7 + $0x14] sm:$0xf]
    %v321 = vld [vmem:[#allocation7 + $0x18] sm:$0xf]
    %v322 = vld [vmem:[#allocation7 + $0x1c] sm:$0xf]
    %v323 = vld [vmem:[#allocation7 + $0x20] sm:$0xf]
    %v324 = vld [vmem:[#allocation7 + $0x24] sm:$0xf]
    %v325 = vld [vmem:[#allocation7 + $0x28] sm:$0xf]
    %v326 = vld [vmem:[#allocation7 + $0x2c] sm:$0xf]
    %v327 = vld [vmem:[#allocation7 + $0x30] sm:$0xf]
    %v328 = vld [vmem:[#allocation7 + $0x34] sm:$0xf]
    %v329 = vld [vmem:[#allocation7 + $0x38] sm:$0xf]
    %v330 = vld [vmem:[#allocation7 + $0x3c] sm:$0xf]
    %v347 = vunpack.c.l.b16 %v315
    %v348 = vunpack.c.l.b16 %v316
    %v349 = vunpack.c.l.b16 %v317
    %v350 = vunpack.c.l.b16 %v318
    %v351 = vunpack.c.l.b16 %v319
    %v352 = vunpack.c.l.b16 %v320
    %v353 = vunpack.c.l.b16 %v321
    %v354 = vunpack.c.l.b16 %v322
    %v355 = vunpack.c.l.b16 %v323
    %v356 = vunpack.c.l.b16 %v324
    %v357 = vunpack.c.l.b16 %v325
    %v358 = vunpack.c.l.b16 %v326
    %v359 = vunpack.c.l.b16 %v327
    %v360 = vunpack.c.l.b16 %v328
    %v361 = vunpack.c.l.b16 %v329
    %v362 = vunpack.c.l.b16 %v330
    %v363 = vpack.c.b16 %v348, %v347
    %v364 = vpack.c.b16 %v350, %v349
    %v365 = vpack.c.b16 %v352, %v351
    %v366 = vpack.c.b16 %v354, %v353
    %v367 = vpack.c.b16 %v356, %v355
    %v368 = vpack.c.b16 %v358, %v357
    %v369 = vpack.c.b16 %v360, %v359
    %v370 = vpack.c.b16 %v362, %v361
    %379 = vmatprep.subr.bf16.mxu0 0
    %380 = vmatpush1.bf16.msra.mxu0 %v363
    %381 = vmatprep.subr.bf16.mxu0 0
    %382 = vmatpush1.bf16.msra.mxu0 %v364
    %383 = vmatprep.subr.bf16.mxu0 0
    %384 = vmatpush1.bf16.msra.mxu0 %v365
    %385 = vmatprep.subr.bf16.mxu0 0
    %386 = vmatpush1.bf16.msra.mxu0 %v366
    %387 = vmatprep.subr.bf16.mxu0 0
    %388 = vmatpush1.bf16.msra.mxu0 %v367
    %389 = vmatprep.subr.bf16.mxu0 0
    %390 = vmatpush1.bf16.msra.mxu0 %v368
    %391 = vmatprep.subr.bf16.mxu0 0
    %392 = vmatpush1.bf16.msra.mxu0 %v369
    %393 = vmatprep.subr.bf16.mxu0 0
    %394 = vmatpush1.bf16.msra.mxu0 %v370
    %395 = vmatprep.subr.bf16.mxu0 0
    %396 = vmatpush1.bf16.msra.mxu0 0
    %397 = vmatprep.subr.bf16.mxu0 0
    %398 = vmatpush1.bf16.msra.mxu0 0
    %399 = vmatprep.subr.bf16.mxu0 0
    %400 = vmatpush1.bf16.msra.mxu0 0
    %401 = vmatprep.subr.bf16.mxu0 0
    %402 = vmatpush1.bf16.msra.mxu0 0
    %403 = vmatprep.subr.bf16.mxu0 0
    %404 = vmatpush1.bf16.msra.mxu0 0
    %405 = vmatprep.subr.bf16.mxu0 0
    %406 = vmatpush1.bf16.msra.mxu0 0
    %407 = vmatprep.subr.bf16.mxu0 0
    %408 = vmatpush1.bf16.msra.mxu0 0
    %409 = vmatprep.subr.bf16.mxu0 0
    %410 = vmatpush1.bf16.msra.mxu0 0
    %411 = vmatprep.mubr.bf16.mxu0 0
    %412 = vmatmul.mubr.bf16.gmra.mrb[0].mxu0 %v298
    %v413 = vpop.f32.mrb[0].mxu0
    %v414 = vadd.f32 0.0, %v413
    %v415 = vpop.f32.mrb[0].mxu0
    %v416 = vpop.f32.mrb[0].mxu0
    %v417 = vpop.f32.mrb[0].mxu0
    %418 = vdwg.mxu0
    %v435 = vunpack.c.l.b16 %v299
    %v436 = vunpack.c.l.b16 %v300
    %v437 = vunpack.c.l.b16 %v301
    %v438 = vunpack.c.l.b16 %v302
    %v439 = vunpack.c.l.b16 %v303
    %v440 = vunpack.c.l.b16 %v304
    %v441 = vunpack.c.l.b16 %v305
    %v442 = vunpack.c.l.b16 %v306
    %v443 = vunpack.c.l.b16 %v307
    %v444 = vunpack.c.l.b16 %v308
    %v445 = vunpack.c.l.b16 %v309
    %v446 = vunpack.c.l.b16 %v310
    %v447 = vunpack.c.l.b16 %v311
    %v448 = vunpack.c.l.b16 %v312
    %v449 = vunpack.c.l.b16 %v313
    %v450 = vunpack.c.l.b16 %v314
    %v451 = vpack.c.b16 %v436, %v435
    %v452 = vpack.c.b16 %v438, %v437
    %v453 = vpack.c.b16 %v440, %v439
    %v454 = vpack.c.b16 %v442, %v441
    %v455 = vpack.c.b16 %v444, %v443
    %v456 = vpack.c.b16 %v446, %v445
    %v457 = vpack.c.b16 %v448, %v447
    %v458 = vpack.c.b16 %v450, %v449
    %467 = vmatprep.subr.bf16.mxu0 0
    %468 = vmatpush1.bf16.msra.mxu0 %v451
    %469 = vmatprep.subr.bf16.mxu0 0
    %470 = vmatpush1.bf16.msra.mxu0 %v452
    %471 = vmatprep.subr.bf16.mxu0 0
    %472 = vmatpush1.bf16.msra.mxu0 %v453
    %473 = vmatprep.subr.bf16.mxu0 0
    %474 = vmatpush1.bf16.msra.mxu0 %v454
    %475 = vmatprep.subr.bf16.mxu0 0
    %476 = vmatpush1.bf16.msra.mxu0 %v455
    %477 = vmatprep.subr.bf16.mxu0 0
    %478 = vmatpush1.bf16.msra.mxu0 %v456
    %479 = vmatprep.subr.bf16.mxu0 0
    %480 = vmatpush1.bf16.msra.mxu0 %v457
    %481 = vmatprep.subr.bf16.mxu0 0
    %482 = vmatpush1.bf16.msra.mxu0 %v458
    %483 = vmatprep.subr.bf16.mxu0 0
    %484 = vmatpush1.bf16.msra.mxu0 0
    %485 = vmatprep.subr.bf16.mxu0 0
    %486 = vmatpush1.bf16.msra.mxu0 0
    %487 = vmatprep.subr.bf16.mxu0 0
    %488 = vmatpush1.bf16.msra.mxu0 0
    %489 = vmatprep.subr.bf16.mxu0 0
    %490 = vmatpush1.bf16.msra.mxu0 0
    %491 = vmatprep.subr.bf16.mxu0 0
    %492 = vmatpush1.bf16.msra.mxu0 0
    %493 = vmatprep.subr.bf16.mxu0 0
    %494 = vmatpush1.bf16.msra.mxu0 0
    %495 = vmatprep.subr.bf16.mxu0 0
    %496 = vmatpush1.bf16.msra.mxu0 0
    %497 = vmatprep.subr.bf16.mxu0 0
    %498 = vmatpush1.bf16.msra.mxu0 0
    %499 = vmatprep.mubr.bf16.mxu0 0
    %500 = vmatmul.mubr.bf16.gmra.mrb[0].mxu0 %v194
    %v501 = vpop.f32.mrb[0].mxu0
    %v502 = vadd.f32 %v414, %v501
    %v503 = vpop.f32.mrb[0].mxu0
    %v504 = vpop.f32.mrb[0].mxu0
    %v505 = vpop.f32.mrb[0].mxu0
    %506 = vdwg.mxu0
    %v507 = vld [vmem:[%s4] sm:$0x1]
    %v509 = vlaneseq
    %v510 = vshrl.u32 %v509, 7
    %v511 = vsub.s32 0, %v510
    %v512 = vrot.slane %v507, %v511
    %v514 = vadd.f32 %v502, %v512
    %v515 = vxor.u32 %v514, 2147483648
    %v516 = vmul.f32 %v515, 1.442695
    %v517 = vpow.pop %v516
    %v518 = vadd.f32 %v517, 1.0
    %v519 = vrcp.pop %v518
    %v520 = vmul.f32 1.0, %v519
    %v521 = vmul.f32 %v514, %v520
    %v522 = vpack.c.bf16 %v521, %v521
    %v523 = vld [vmem:[#allocation8] sm:$0xf]
    %v524 = vld [vmem:[#allocation8 + $0x4] sm:$0xf]
    %v525 = vld [vmem:[#allocation8 + $0x8] sm:$0xf]
    %v526 = vld [vmem:[#allocation8 + $0xc] sm:$0xf]
    %v527 = vld [vmem:[#allocation8 + $0x10] sm:$0xf]
    %v528 = vld [vmem:[#allocation8 + $0x14] sm:$0xf]
    %v529 = vld [vmem:[#allocation8 + $0x18] sm:$0xf]
    %v530 = vld [vmem:[#allocation8 + $0x1c] sm:$0xf]
    %v531 = vld [vmem:[#allocation8 + $0x20] sm:$0xf]
    %v532 = vld [vmem:[#allocation8 + $0x24] sm:$0xf]
    %v533 = vld [vmem:[#allocation8 + $0x28] sm:$0xf]
    %v534 = vld [vmem:[#allocation8 + $0x2c] sm:$0xf]
    %v535 = vld [vmem:[#allocation8 + $0x30] sm:$0xf]
    %v536 = vld [vmem:[#allocation8 + $0x34] sm:$0xf]
    %v537 = vld [vmem:[#allocation8 + $0x38] sm:$0xf]
    %v538 = vld [vmem:[#allocation8 + $0x3c] sm:$0xf]
    %v539 = vld [vmem:[%s6] sm:$0x1]
    %v541 = vlaneseq
    %v542 = vshrl.u32 %v541, 7
    %v543 = vsub.s32 0, %v542
    %v544 = vrot.slane %v539, %v543
    %v562 = vunpack.c.l.b16 %v523
    %v563 = vunpack.c.l.b16 %v524
    %v564 = vunpack.c.l.b16 %v525
    %v565 = vunpack.c.l.b16 %v526
    %v566 = vunpack.c.l.b16 %v527
    %v567 = vunpack.c.l.b16 %v528
    %v568 = vunpack.c.l.b16 %v529
    %v569 = vunpack.c.l.b16 %v530
    %v570 = vunpack.c.l.b16 %v531
    %v571 = vunpack.c.l.b16 %v532
    %v572 = vunpack.c.l.b16 %v533
    %v573 = vunpack.c.l.b16 %v534
    %v574 = vunpack.c.l.b16 %v535
    %v575 = vunpack.c.l.b16 %v536
    %v576 = vunpack.c.l.b16 %v537
    %v577 = vunpack.c.l.b16 %v538
    %v578 = vpack.c.b16 %v563, %v562
    %v579 = vpack.c.b16 %v565, %v564
    %v580 = vpack.c.b16 %v567, %v566
    %v581 = vpack.c.b16 %v569, %v568
    %v582 = vpack.c.b16 %v571, %v570
    %v583 = vpack.c.b16 %v573, %v572
    %v584 = vpack.c.b16 %v575, %v574
    %v585 = vpack.c.b16 %v577, %v576
    %594 = vmatprep.subr.bf16.mxu0 0
    %595 = vmatpush1.bf16.msra.mxu0 %v578
    %596 = vmatprep.subr.bf16.mxu0 0
    %597 = vmatpush1.bf16.msra.mxu0 %v579
    %598 = vmatprep.subr.bf16.mxu0 0
    %599 = vmatpush1.bf16.msra.mxu0 %v580
    %600 = vmatprep.subr.bf16.mxu0 0
    %601 = vmatpush1.bf16.msra.mxu0 %v581
    %602 = vmatprep.subr.bf16.mxu0 0
    %603 = vmatpush1.bf16.msra.mxu0 %v582
    %604 = vmatprep.subr.bf16.mxu0 0
    %605 = vmatpush1.bf16.msra.mxu0 %v583
    %606 = vmatprep.subr.bf16.mxu0 0
    %607 = vmatpush1.bf16.msra.mxu0 %v584
    %608 = vmatprep.subr.bf16.mxu0 0
    %609 = vmatpush1.bf16.msra.mxu0 %v585
    %610 = vmatprep.subr.bf16.mxu0 0
    %611 = vmatpush1.bf16.msra.mxu0 0
    %612 = vmatprep.subr.bf16.mxu0 0
    %613 = vmatpush1.bf16.msra.mxu0 0
    %614 = vmatprep.subr.bf16.mxu0 0
    %615 = vmatpush1.bf16.msra.mxu0 0
    %616 = vmatprep.subr.bf16.mxu0 0
    %617 = vmatpush1.bf16.msra.mxu0 0
    %618 = vmatprep.subr.bf16.mxu0 0
    %619 = vmatpush1.bf16.msra.mxu0 0
    %620 = vmatprep.subr.bf16.mxu0 0
    %621 = vmatpush1.bf16.msra.mxu0 0
    %622 = vmatprep.subr.bf16.mxu0 0
    %623 = vmatpush1.bf16.msra.mxu0 0
    %624 = vmatprep.subr.bf16.mxu0 0
    %625 = vmatpush1.bf16.msra.mxu0 0
    %626 = vmatprep.mubr.bf16.mxu0 0
    %627 = vmatmul.mubr.bf16.gmra.mrb[0].mxu0 %v522
    %v628 = vpop.f32.mrb[0].mxu0
    %v629 = vadd.f32 %v544, %v628
    %v630 = vpop.f32.mrb[0].mxu0
    %v631 = vpop.f32.mrb[0].mxu0
    %v632 = vpop.f32.mrb[0].mxu0
    %633 = vdwg.mxu0
    %634 = vst [vmem:[#allocation10] sm:$0xff] %v629
    // Predicated region
    $region46: #{tpu_custom_call.1} parent=1 // pred_check
      _
    $region47: #{tpu_custom_call.1} parent=1 // pred_check_branch
      %636 = sbr.rel (0) target = $region49
    $region48: #{tpu_custom_call.1} parent=1 // pred_region
      %s638 = ssub.s32 128, 128
      %639 = vsyncadd [#allocation4], %s638
      %s641 = sshll.u32 [#allocation10], 4
      %s642 = int_to_ptr.vmem [resolvable:$true] %s641
      %644 = dma.vmem_to_hbm [thread:$0]  %s642, 128, %s7, [#allocation4]
    $region49: #{tpu_custom_call.1} parent=1 // pred_fallthru
      _
    // Predicated region
    $region50: #{tpu_custom_call.1} parent=1 // pred_check
      _
    $region51: #{tpu_custom_call.1} parent=1 // pred_check_branch
      %646 = sbr.rel (0) target = $region53
    $region52: #{tpu_custom_call.1} parent=1 // pred_region
      %647 = dma.done [#allocation4], 128
    $region53: #{tpu_custom_call.1} parent=1 // pred_fallthru
      _
    %648 = vsyncpa [#allocation3], 1
    %649 = vsyncpa [#allocation6], 1
    %650 = vsyncpa [#allocation9], 1
    %651 = vsyncpa [#allocation4], 1

</llo_original>
